<compile_context>
chip_gen: v6e
topology: v6e:2x2x1
jax: 0.10.0
libtpu: 0.0.40
codegen_flags: <defaults>
</compile_context>

<pallas_src>
import functools

import jax
import jax.numpy as jnp
import numpy as np
from jax.experimental import pallas as pl
from jax.experimental.pallas import tpu as pltpu


# --------------------------------------------------------------------------
# Kernels
# --------------------------------------------------------------------------
def _bn_stats_kernel(x_ref, s1_ref, s2_ref, *, bn, ts, hw):
    # x_ref : (bn, Cin, ts) spatial tile of `bn` images
    # s1_ref: (Cin, 1)      per-channel sum       (resident across spatial axis)
    # s2_ref: (Cin, 1)      per-channel sum of squares
    @pl.when(pl.program_id(1) == 0)
    def _():
        s1_ref[...] = jnp.zeros_like(s1_ref)
        s2_ref[...] = jnp.zeros_like(s2_ref)

    # Columns beyond hw in a ragged last tile contain garbage -> mask them.
    valid = hw - pl.program_id(1) * ts
    acc1 = jnp.zeros(s1_ref.shape, jnp.float32)
    acc2 = jnp.zeros(s2_ref.shape, jnp.float32)
    for i in range(bn):                               # static, small unroll
        xi = x_ref[i]                                 # (Cin, ts)
        col = jax.lax.broadcasted_iota(jnp.int32, xi.shape, 1)
        xi = jnp.where(col < valid, xi, 0.0)
        acc1 = acc1 + jnp.sum(xi, axis=1, keepdims=True)
        acc2 = acc2 + jnp.sum(xi * xi, axis=1, keepdims=True)
    s1_ref[...] += acc1
    s2_ref[...] += acc2


def _bn_relu_conv_kernel(x_ref, scale_ref, shift_ref, w_ref, b_ref, o_ref, *, bn):
    # x_ref:     (bn, Cin,  ts)   lane-dense input tile
    # scale_ref: (Cin, 1)         folded BN scale (gamma / sqrt(var+eps))
    # shift_ref: (Cin, 1)         folded BN shift (beta - mean*scale)
    # w_ref:     (Cout, Cin)      1x1 conv weight as matmul operand
    # b_ref:     (Cout, 1)        conv bias
    # o_ref:     (bn, Cout, ts)   lane-dense output tile
    w = w_ref[...]
    b = b_ref[...]
    scale = scale_ref[...]
    shift = shift_ref[...]
    for i in range(bn):                               # static, small unroll
        y = jnp.maximum(x_ref[i] * scale + shift, 0.0)          # BN + ReLU
        o_ref[i] = (jnp.dot(w, y, preferred_element_type=jnp.float32) + b
                    ).astype(o_ref.dtype)


# --------------------------------------------------------------------------
# Tiling / VMEM helpers
# --------------------------------------------------------------------------
def _vmem_capacity_bytes():
    try:
        return int(pltpu.get_tpu_info().vmem_capacity_bytes)
    except Exception:
        return 64 << 20          # conservative fallback: v7x per-TC VMEM


def _choose_tiling(N, HW, Cin, Cout, budget_bytes):
    """Pick (batch_block, spatial_tile) so each grid step moves >=512 lane
    columns where possible, tiles stay within `budget_bytes`, and the grid
    exposes >=2 programs (v7x has two TensorCores)."""
    # f32 bytes per lane column held in VMEM by the conv kernel:
    # double-buffered x tile + the ReLU temp y + double-buffered out tile.
    per_col = (2 * Cin + Cin + 2 * Cout) * 4
    max_cols = max(128, budget_bytes // per_col)

    if HW >= 512:
        # Spatial tiling, one image per step; fixed 128-multiple tile, cdiv grid.
        bn = 1
        ts = min(2048, (max_cols // 128) * 128)
        ts = min(ts, ((HW + 127) // 128) * 128)
        ts = max(128, ts)
    else:
        # Small spatial extent: block several images per step (amortizes the
        # ~0.35us per-grid-step overhead).  Keep bn a divisor of N so the stats
        # kernel never sees batch padding.
        ts = HW
        bn = min(N, max(1, 512 // max(HW, 1)), max(1, max_cols // max(HW, 1)))
        bn = max(1, bn)
        while bn > 1 and N % bn != 0:
            bn -= 1

    def n_steps(bn_, ts_):
        return (N // bn_) * (-(-HW // ts_))

    if n_steps(bn, ts) < 2:
        if bn > 1:
            bn2 = bn // 2
            while bn2 > 1 and N % bn2 != 0:
                bn2 -= 1
            bn = max(1, bn2)
        elif ts >= 256 and ts % 256 == 0:
            ts //= 2
    return bn, ts


# --------------------------------------------------------------------------
# Wrapper
# --------------------------------------------------------------------------
def bn_relu_conv(x_nchw, gamma, beta, conv_w, conv_b, *, eps=1e-5):
    """Forward pass of BnReluConv (kernelSize=1, stride=1, padding=0).

    x_nchw : (N, Cin, H, W) f32; gamma/beta: (Cin,); conv_w: (Cout, Cin, 1, 1);
    conv_b: (Cout,).  Returns (N, Cout, H, W) f32.
    """
    N, Cin, H, W = x_nchw.shape
    Cout = conv_w.shape[0]
    HW = H * W

    # Contiguous reshape -- a view, no HBM traffic.
    x = x_nchw.reshape(N, Cin, HW).astype(jnp.float32)

    vmem_cap = _vmem_capacity_bytes()
    budget = int(min(max(vmem_cap // 6, 8 << 20), 24 << 20))
    bn, ts = _choose_tiling(N, HW, Cin, Cout, budget)
    nb = N // bn
    ns = -(-HW // ts)
    grid = (nb, ns)

    # ---- pass 1: per-channel batch statistics in ONE read of x ------------
    stats_kernel = functools.partial(_bn_stats_kernel, bn=bn, ts=ts, hw=HW)
    ps1, ps2 = pl.pallas_call(
        stats_kernel,
        out_shape=(jax.ShapeDtypeStruct((nb, Cin, 1), jnp.float32),
                   jax.ShapeDtypeStruct((nb, Cin, 1), jnp.float32)),
        grid_spec=pltpu.PrefetchScalarGridSpec(
            num_scalar_prefetch=0,
            grid=grid,
            in_specs=[pl.BlockSpec((bn, Cin, ts), lambda n, s: (n, 0, s))],
            out_specs=[pl.BlockSpec((None, Cin, 1), lambda n, s: (n, 0, 0)),
                       pl.BlockSpec((None, Cin, 1), lambda n, s: (n, 0, 0))],
        ),
        compiler_params=pltpu.CompilerParams(
            dimension_semantics=("parallel", "arbitrary")),
        cost_estimate=pl.CostEstimate(
            flops=3 * N * HW * Cin, transcendentals=0,
            bytes_accessed=4 * (N * Cin * HW + 2 * nb * Cin)),
    )(x)

    cnt = float(N * HW)
    s1 = jnp.sum(ps1, axis=0).reshape(Cin)
    s2 = jnp.sum(ps2, axis=0).reshape(Cin)
    mean = s1 / cnt
    # TODO(synk): one-pass variance (E[x^2] - mean^2) can lose precision when
    # |mean| >> std; switch to a two-pass / Welford stats kernel if needed.
    var = jnp.maximum(s2 / cnt - mean * mean, 0.0)
    scale = gamma.astype(jnp.float32) / jnp.sqrt(var + eps)
    shift = beta.astype(jnp.float32) - mean * scale

    w2d = conv_w.reshape(Cout, Cin).astype(jnp.float32)
    bias = conv_b.reshape(Cout, 1).astype(jnp.float32)

    # ---- pass 2: fused normalize + ReLU + 1x1-conv matmul ------------------
    # VMEM estimate counts double-buffered x/out tiles, the ReLU temp y, and
    # the double-buffered constant operands.  Cap the scoped limit per
    # generation (v7x has only 64 MiB physical VMEM per TensorCore).
    est_vmem = 4 * (2 * bn * (Cin + Cout) * ts + Cin * ts
                    + 2 * (Cout * Cin + 2 * Cin + Cout))
    cp_kwargs = dict(dimension_semantics=("parallel", "parallel"))
    if est_vmem > (14 << 20):
        cp_kwargs["vmem_limit_bytes"] = int(min(est_vmem + (4 << 20),
                                                (vmem_cap * 3) // 4))

    conv_kernel = functools.partial(_bn_relu_conv_kernel, bn=bn)
    out = pl.pallas_call(
        conv_kernel,
        out_shape=jax.ShapeDtypeStruct((N, Cout, HW), jnp.float32),
        grid_spec=pltpu.PrefetchScalarGridSpec(
            num_scalar_prefetch=0,
            grid=grid,
            in_specs=[
                pl.BlockSpec((bn, Cin, ts), lambda n, s: (n, 0, s)),  # x tile
                pl.BlockSpec((Cin, 1), lambda n, s: (0, 0)),          # scale
                pl.BlockSpec((Cin, 1), lambda n, s: (0, 0)),          # shift
                pl.BlockSpec((Cout, Cin), lambda n, s: (0, 0)),       # conv W
                pl.BlockSpec((Cout, 1), lambda n, s: (0, 0)),         # conv b
            ],
            out_specs=pl.BlockSpec((bn, Cout, ts), lambda n, s: (n, 0, s)),
        ),
        compiler_params=pltpu.CompilerParams(**cp_kwargs),
        cost_estimate=pl.CostEstimate(
            flops=2 * N * HW * Cin * Cout + 3 * N * HW * Cin,
            transcendentals=0,
            bytes_accessed=4 * (N * Cin * HW + N * Cout * HW
                                + Cout * Cin + 3 * Cin + Cout)),
    )(x, scale.reshape(Cin, 1), shift.reshape(Cin, 1), w2d, bias)

    # Contiguous reshape back to NCHW -- a view, no extra HBM pass.
    return out.reshape(N, Cout, H, W)


# --------------------------------------------------------------------------
# Reference + test
# --------------------------------------------------------------------------
def _reference(x_nchw, gamma, beta, conv_w, conv_b, eps=1e-5):
    mean = jnp.mean(x_nchw, axis=(0, 2, 3), keepdims=True)
    var = jnp.mean((x_nchw - mean) ** 2, axis=(0, 2, 3), keepdims=True)
    xn = (x_nchw - mean) / jnp.sqrt(var + eps)
    xn = xn * gamma[None, :, None, None] + beta[None, :, None, None]
    xr = jnp.maximum(xn, 0.0)
    out = jnp.einsum("nchw,oc->nohw", xr, conv_w.reshape(conv_w.shape[0], -1))
    return out + conv_b[None, :, None, None]


if __name__ == "__main__":
    # TODO(synk): only the default kernelSize=1/stride=1/padding=0 conv is
    # implemented (a general KxK conv would need an im2col/windowed kernel);
    # nn.BatchNorm2d running_mean/running_var buffer updates are not emulated
    # (forward output in training mode is unaffected).
    key = jax.random.PRNGKey(0)
    k1, k2, k3, k4, k5 = jax.random.split(key, 5)

    N, Cin, H, W = 2, 4, 16, 16
    Cout = 8

    x = jax.random.normal(k1, (N, Cin, H, W), dtype=jnp.float32)
    gamma = jax.random.normal(k2, (Cin,), dtype=jnp.float32) * 0.1 + 1.0
    beta = jax.random.normal(k3, (Cin,), dtype=jnp.float32) * 0.1
    conv_w = jax.random.normal(k4, (Cout, Cin, 1, 1), dtype=jnp.float32) * 0.5
    conv_b = jax.random.normal(k5, (Cout,), dtype=jnp.float32) * 0.1

    out = bn_relu_conv(x, gamma, beta, conv_w, conv_b)
    out = jax.block_until_ready(out)

    ref = jax.block_until_ready(_reference(x, gamma, beta, conv_w, conv_b))
    np.testing.assert_allclose(np.asarray(out), np.asarray(ref), rtol=1e-4, atol=1e-4)

    print("KERNEL_OK")
</pallas_src>

<mosaic_0001>
module attributes {stable_mosaic.version = 11 : i64} {
  func.func @_bn_stats_kernel(%arg0: i32, %arg1: i32, %arg2: memref<1x4x256xf32, #tpu.memory_space<vmem>>, %arg3: memref<1x4x1xf32, #tpu.memory_space<vmem>>, %arg4: memref<1x4x1xf32, #tpu.memory_space<vmem>>) attributes {dimension_semantics = [#tpu.dimension_semantics<parallel>, #tpu.dimension_semantics<arbitrary>], iteration_bounds = array<i64: 2, 1>, scalar_prefetch = 0 : i64, scratch_operands = 0 : i64, tpu.core_type = #tpu.core_type<tc>, window_params = [{transform_indices = @transform_0, window_bounds = array<i64: 1, 4, 256>}, {transform_indices = @transform_1, window_bounds = array<i64: 1, 4, 1>}, {transform_indices = @transform_2, window_bounds = array<i64: 1, 4, 1>}]} {
    %c0_i32 = arith.constant 0 : i32
    %0 = arith.cmpi eq, %arg1, %c0_i32 : i32
    %1 = arith.extui %0 : i1 to i32
    %c0_i32_0 = arith.constant 0 : i32
    %2 = arith.cmpi ne, %1, %c0_i32_0 : i32
    scf.if %2 {
      %cst_20 = arith.constant 0.000000e+00 : f32
      %33 = vector.broadcast %cst_20 : f32 to vector<4x1xf32>
      %c0_21 = arith.constant 0 : index
      %c0_22 = arith.constant 0 : index
      %c0_23 = arith.constant 0 : index
      %34 = vector.load %arg3[%c0_21, %c0_22, %c0_23] : memref<1x4x1xf32, #tpu.memory_space<vmem>>, vector<1x4x1xf32>
      %35 = vector.shape_cast %34 : vector<1x4x1xf32> to vector<4x1xf32>
      %36 = vector.shape_cast %33 : vector<4x1xf32> to vector<1x4x1xf32>
      tpu.vector_store %arg3[%c0_21, %c0_22, %c0_23], %36 {strides = array<i32>} : memref<1x4x1xf32, #tpu.memory_space<vmem>>, vector<1x4x1xf32>,
      %cst_24 = arith.constant 0.000000e+00 : f32
      %37 = vector.broadcast %cst_24 : f32 to vector<4x1xf32>
      %c0_25 = arith.constant 0 : index
      %c0_26 = arith.constant 0 : index
      %c0_27 = arith.constant 0 : index
      %38 = vector.load %arg4[%c0_25, %c0_26, %c0_27] : memref<1x4x1xf32, #tpu.memory_space<vmem>>, vector<1x4x1xf32>
      %39 = vector.shape_cast %38 : vector<1x4x1xf32> to vector<4x1xf32>
      %40 = vector.shape_cast %37 : vector<4x1xf32> to vector<1x4x1xf32>
      tpu.vector_store %arg4[%c0_25, %c0_26, %c0_27], %40 {strides = array<i32>} : memref<1x4x1xf32, #tpu.memory_space<vmem>>, vector<1x4x1xf32>,
    } else {
    }
    %c256_i32 = arith.constant 256 : i32
    %3 = arith.muli %arg1, %c256_i32 : i32
    %c256_i32_1 = arith.constant 256 : i32
    %4 = arith.subi %c256_i32_1, %3 : i32
    %cst = arith.constant 0.000000e+00 : f32
    %5 = vector.broadcast %cst : f32 to vector<4x1xf32>
    %cst_2 = arith.constant 0.000000e+00 : f32
    %6 = vector.broadcast %cst_2 : f32 to vector<4x1xf32>
    %c0 = arith.constant 0 : index
    %c0_3 = arith.constant 0 : index
    %c0_4 = arith.constant 0 : index
    %7 = vector.load %arg2[%c0, %c0_3, %c0_4] : memref<1x4x256xf32, #tpu.memory_space<vmem>>, vector<1x4x256xf32>
    %8 = vector.shape_cast %7 : vector<1x4x256xf32> to vector<4x256xf32>
    %9 = tpu.iota {dimensions = array<i32: 1>} : vector<4x256xi32>
    %10 = vector.broadcast %4 : i32 to vector<4x256xi32>
    %11 = arith.cmpi slt, %9, %10 : vector<4x256xi32>
    %cst_5 = arith.constant 0.000000e+00 : f32
    %12 = vector.broadcast %cst_5 : f32 to vector<4x256xf32>
    %13 = arith.select %11, %8, %12 : vector<4x256xi1>, vector<4x256xf32>
    %cst_6 = arith.constant dense<0.000000e+00> : vector<4xf32>
    %14 = vector.multi_reduction <add>, %13, %cst_6 [1] : vector<4x256xf32> to vector<4xf32>
    %15 = vector.shape_cast %14 : vector<4xf32> to vector<4x1xf32>
    %16 = arith.addf %5, %15 : vector<4x1xf32>
    %17 = arith.mulf %13, %13 : vector<4x256xf32>
    %cst_7 = arith.constant dense<0.000000e+00> : vector<4xf32>
    %18 = vector.multi_reduction <add>, %17, %cst_7 [1] : vector<4x256xf32> to vector<4xf32>
    %19 = vector.shape_cast %18 : vector<4xf32> to vector<4x1xf32>
    %20 = arith.addf %6, %19 : vector<4x1xf32>
    %c0_8 = arith.constant 0 : index
    %c0_9 = arith.constant 0 : index
    %c0_10 = arith.constant 0 : index
    %21 = vector.load %arg3[%c0_8, %c0_9, %c0_10] : memref<1x4x1xf32, #tpu.memory_space<vmem>>, vector<1x4x1xf32>
    %22 = vector.shape_cast %21 : vector<1x4x1xf32> to vector<4x1xf32>
    %23 = arith.addf %22, %16 : vector<4x1xf32>
    %c0_11 = arith.constant 0 : index
    %c0_12 = arith.constant 0 : index
    %c0_13 = arith.constant 0 : index
    %24 = vector.load %arg3[%c0_11, %c0_12, %c0_13] : memref<1x4x1xf32, #tpu.memory_space<vmem>>, vector<1x4x1xf32>
    %25 = vector.shape_cast %24 : vector<1x4x1xf32> to vector<4x1xf32>
    %26 = vector.shape_cast %23 : vector<4x1xf32> to vector<1x4x1xf32>
    tpu.vector_store %arg3[%c0_11, %c0_12, %c0_13], %26 {strides = array<i32>} : memref<1x4x1xf32, #tpu.memory_space<vmem>>, vector<1x4x1xf32>,
    %c0_14 = arith.constant 0 : index
    %c0_15 = arith.constant 0 : index
    %c0_16 = arith.constant 0 : index
    %27 = vector.load %arg4[%c0_14, %c0_15, %c0_16] : memref<1x4x1xf32, #tpu.memory_space<vmem>>, vector<1x4x1xf32>
    %28 = vector.shape_cast %27 : vector<1x4x1xf32> to vector<4x1xf32>
    %29 = arith.addf %28, %20 : vector<4x1xf32>
    %c0_17 = arith.constant 0 : index
    %c0_18 = arith.constant 0 : index
    %c0_19 = arith.constant 0 : index
    %30 = vector.load %arg4[%c0_17, %c0_18, %c0_19] : memref<1x4x1xf32, #tpu.memory_space<vmem>>, vector<1x4x1xf32>
    %31 = vector.shape_cast %30 : vector<1x4x1xf32> to vector<4x1xf32>
    %32 = vector.shape_cast %29 : vector<4x1xf32> to vector<1x4x1xf32>
    tpu.vector_store %arg4[%c0_17, %c0_18, %c0_19], %32 {strides = array<i32>} : memref<1x4x1xf32, #tpu.memory_space<vmem>>, vector<1x4x1xf32>,
    return
  }
  func.func @transform_0(%arg0: i32, %arg1: i32) -> (i32, i32, i32) {
    %c0_i32 = arith.constant 0 : i32
    %c0_i32_0 = arith.constant 0 : i32
    return %arg0, %c0_i32, %arg1 : i32, i32, i32
  }
  func.func @transform_1(%arg0: i32, %arg1: i32) -> (i32, i32, i32) {
    %c0_i32 = arith.constant 0 : i32
    %c0_i32_0 = arith.constant 0 : i32
    %c0_i32_1 = arith.constant 0 : i32
    return %arg0, %c0_i32, %c0_i32_0 : i32, i32, i32
  }
  func.func @transform_2(%arg0: i32, %arg1: i32) -> (i32, i32, i32) {
    %c0_i32 = arith.constant 0 : i32
    %c0_i32_0 = arith.constant 0 : i32
    %c0_i32_1 = arith.constant 0 : i32
    return %arg0, %c0_i32, %c0_i32_0 : i32, i32, i32
  }
}

</mosaic_0001>

<llo_original>
// kernel: tpu_custom_call.1
$region0: #{tpu_custom_call.1}
  #allocation0 [shape = 'u32[]', space=smem, size = 0x4, offset = 0x4, fixed_abs, tag = 'smem constant byte address 0x4 - core index']
  #allocation1 [shape = 'u32[144,128]{1,0:T(1,128)}', space=vmem, size = 0x12000, scoped, tag = 'internal scratch']
  %s0 = inlined_call_operand.hbm [shape: f32[2,4,256], index: 0, kind: input, shape index: {}]
  %s1 = inlined_call_operand.vmem [shape: f32[2,4,1], index: 1, kind: output, shape index: {0}]
  %s2 = inlined_call_operand.vmem [shape: f32[2,4,1], index: 2, kind: output, shape index: {1}]
  %3 = xla_tuple %s1, %s2
  %s4 = sld [smem:[#allocation0]]
  $region53: #{tpu_custom_call.1} parent=0
    _
  %s6 = ssub.s32 1, %s4
  %s7 = scalar_select 0, %s6, %s4
  $region1: #{tpu_custom_call.1} parent=0
    #allocation2 [shape = 'u8[8192]{0}', space=vmem, size = 0x2000, scoped, tag = 'input window, operand 0']
    #allocation3 [shape = 's32[2]{0}', space=sflag, size = 0x8, scoped, tag = 'scoped memory for tpu_custom_call.1']
    %8 = vsyncpa [#allocation3], 0
    %s9 = scalar_lea.sflag [#allocation3], 1
    %10 = vsyncpa %s9, 0
    loop: start=0, step=1, limit=4
    $region2: #{tpu_custom_call.1} parent=1 // loop_pre_header
      _
    $region3: #{tpu_custom_call.1} parent=1 // loop_header
      %s12 = sphi 0, %s16
      %p13 = scmp.ge.s32.totalorder %s12, 4
      %s19 = sphi 0, %s31
      %s20 = sphi 0, %s27
      %s21 = sphi 0, %s19
      %s22 = sphi 0, %s20
      %s23 = sphi 0, %s21
      %s24 = sphi 0, %s22
      %s36 = sphi 0, %s38
      %s39 = sphi 0, %s36
      %s40 = sphi 0, %s39
      %s56 = sphi 0, %s40
      %s62 = sphi 0, %s64
      %s65 = sphi 0, %s62
      %s66 = sphi 0, %s65
      %s82 = sphi 0, %s66
      %s88 = sphi 0, %s90
      %s91 = sphi 0, %s88
      %s92 = sphi 0, %s91
      %s108 = sphi 0, %s92
    $region4: #{tpu_custom_call.1} parent=1 // loop_header_branch
      %15 = sbr.rel (%p13) target = $region8
    $region5: #{tpu_custom_call.1} parent=1 // loop_body
      %s17 = ssub.s32 %s12, 1
      %s18 = ssub.s32 %s12, 2
      %s25 = sadd.s32 1, %s20
      %p26 = scmp.ge.s32.totalorder %s25, 1
      %s27 = scalar_select %p26, 0, %s25
      %s28 = sadd.s32 1, %s19
      %s29 = scalar_select %p26, %s28, %s19
      %p30 = scmp.ge.s32.totalorder %s29, 2
      %s31 = scalar_select %p30, 0, %s29
      %s32 = ssub.s32 %s19, %s31
      %s33 = ssub.s32 %s20, %s27
      %s34 = sor.u32 %s32, %s33
      %p35 = scmp.eq.s32.totalorder %s34, 0
      %s37 = sadd.s32 %s36, 1
      %s38 = scalar_select %p35, %s36, %s37
      %p41 = pneg %p35
      %p42 = scmp.eq.s32.totalorder %s12, 1
      %p43 = por %p41, %p42
      %p44 = scmp.ne.s32.totalorder %s36, %s39
      %p45 = scmp.eq.s32.totalorder %s12, 0
      %p46 = por %p44, %p45
      %p47 = scmp.ne.s32.totalorder %s36, %s39
      %p48 = scmp.eq.s32.totalorder %s17, 1
      %p49 = por %p47, %p48
      %p50 = scmp.ne.s32.totalorder %s39, %s40
      %p51 = scmp.eq.s32.totalorder %s17, 0
      %p52 = por %p50, %p51
      %p53 = scmp.ne.s32.totalorder %s39, %s40
      %p54 = scmp.eq.s32.totalorder %s18, 1
      %p55 = por %p53, %p54
      %p57 = scmp.ne.s32.totalorder %s40, %s56
      %p58 = scmp.eq.s32.totalorder %s18, 0
      %p59 = por %p57, %p58
      %s60 = ssub.s32 %s19, %s31
      %p61 = scmp.eq.s32.totalorder %s60, 0
      %s63 = sadd.s32 %s62, 1
      %s64 = scalar_select %p61, %s62, %s63
      %p67 = pneg %p61
      %p68 = scmp.eq.s32.totalorder %s12, 1
      %p69 = por %p67, %p68
      %p70 = scmp.ne.s32.totalorder %s62, %s65
      %p71 = scmp.eq.s32.totalorder %s12, 0
      %p72 = por %p70, %p71
      %p73 = scmp.ne.s32.totalorder %s62, %s65
      %p74 = scmp.eq.s32.totalorder %s17, 1
      %p75 = por %p73, %p74
      %p76 = scmp.ne.s32.totalorder %s65, %s66
      %p77 = scmp.eq.s32.totalorder %s17, 0
      %p78 = por %p76, %p77
      %p79 = scmp.ne.s32.totalorder %s65, %s66
      %p80 = scmp.eq.s32.totalorder %s18, 1
      %p81 = por %p79, %p80
      %p83 = scmp.ne.s32.totalorder %s66, %s82
      %p84 = scmp.eq.s32.totalorder %s18, 0
      %p85 = por %p83, %p84
      %s86 = ssub.s32 %s19, %s31
      %p87 = scmp.eq.s32.totalorder %s86, 0
      %s89 = sadd.s32 %s88, 1
      %s90 = scalar_select %p87, %s88, %s89
      %p93 = pneg %p87
      %p94 = scmp.eq.s32.totalorder %s12, 1
      %p95 = por %p93, %p94
      %p96 = scmp.ne.s32.totalorder %s88, %s91
      %p97 = scmp.eq.s32.totalorder %s12, 0
      %p98 = por %p96, %p97
      %p99 = scmp.ne.s32.totalorder %s88, %s91
      %p100 = scmp.eq.s32.totalorder %s17, 1
      %p101 = por %p99, %p100
      %p102 = scmp.ne.s32.totalorder %s91, %s92
      %p103 = scmp.eq.s32.totalorder %s17, 0
      %p104 = por %p102, %p103
      %p105 = scmp.ne.s32.totalorder %s91, %s92
      %p106 = scmp.eq.s32.totalorder %s18, 1
      %p107 = por %p105, %p106
      %p109 = scmp.ne.s32.totalorder %s92, %s108
      %p110 = scmp.eq.s32.totalorder %s18, 0
      %p111 = por %p109, %p110
      %p112 = scmp.le.s32.totalorder 1, %s12
      %p113 = scmp.lt.s32.totalorder %s12, 3
      %p114 = pnand %p112, %p113
      %p115 = pneg %p114
      // Predicated region
      $region9: #{tpu_custom_call.1} parent=5 // pred_check
        _
      $region10: #{tpu_custom_call.1} parent=5 // pred_check_branch
        %117 = sbr.rel (%p114) target = $region12
      $region11: #{tpu_custom_call.1} parent=5 // pred_region
        %s118 = ssub.s32 %s12, 1
      $region12: #{tpu_custom_call.1} parent=5 // pred_fallthru
        _
      %p119 = scmp.lt.s32.totalorder %s12, 2
      // Predicated region
      $region13: #{tpu_custom_call.1} parent=5 // pred_check
        %p120 = pneg %p119
      $region14: #{tpu_custom_call.1} parent=5 // pred_check_branch
        %122 = sbr.rel (%p120) target = $region16
      $region15: #{tpu_custom_call.1} parent=5 // pred_region
        // Predicated region
        $region17: #{tpu_custom_call.1} parent=15 // pred_check
          %p123 = pneg %p46
        $region18: #{tpu_custom_call.1} parent=15 // pred_check_branch
          %125 = sbr.rel (%p123) target = $region20
        $region19: #{tpu_custom_call.1} parent=15 // pred_region
          %s126 = sand.u32 %s36, 1
          %s127 = scalar_lea.sflag [#allocation3], %s126
          %s128 = sand.u32 %s36, 1
          %s129 = smul.addr %s128, 8
          %s130 = scalar_lea.vmem [#allocation2], %s129
          %s131 = smul.u32 2, %s20
          %s133 = ssub.s32 128, 128
          %134 = vsyncadd %s127, %s133
          %s135 = smul.addr %s19, 2
          %s136 = sadd.s32 %s131, %s135
          %s137 = smul.addr %s136, 64
          %s138 = scalar_lea.hbm %s0, %s137
          %s140 = sshll.u32 %s130, 4
          %s141 = int_to_ptr.vmem [resolvable:$true] %s140
          %143 = dma.hbm_to_vmem [thread:$0]  %s138, 128, %s141, %s127
        $region20: #{tpu_custom_call.1} parent=15 // pred_fallthru
          _
      $region16: #{tpu_custom_call.1} parent=5 // pred_fallthru
        _
      %p144 = scmp.le.s32.totalorder 1, %s12
      %p145 = scmp.lt.s32.totalorder %s12, 3
      %p146 = pnand %p144, %p145
      %p147 = pneg %p146
      // Predicated region
      $region21: #{tpu_custom_call.1} parent=5 // pred_check
        _
      $region22: #{tpu_custom_call.1} parent=5 // pred_check_branch
        %149 = sbr.rel (%p146) target = $region24
      $region23: #{tpu_custom_call.1} parent=5 // pred_region
        %s150 = ssub.s32 %s12, 1
        %s151 = sand.u32 %s39, 1
        %s152 = scalar_lea.sflag [#allocation3], %s151
        %s153 = sand.u32 %s39, 1
        %s154 = smul.addr %s153, 8
        %s155 = scalar_lea.vmem [#allocation2], %s154
        // Predicated region
        $region25: #{tpu_custom_call.1} parent=23 // pred_check
          %p156 = pneg %p52
        $region26: #{tpu_custom_call.1} parent=23 // pred_check_branch
          %158 = sbr.rel (%p156) target = $region28
        $region27: #{tpu_custom_call.1} parent=23 // pred_region
          %159 = dma.done %s152, 128
        $region28: #{tpu_custom_call.1} parent=23 // pred_fallthru
          _
        %s160 = sand.u32 %s39, 1
        %s161 = scalar_lea.sflag [#allocation3], %s160
        %s162 = sand.u32 %s39, 1
        %s163 = smul.addr %s162, 8
        %s164 = scalar_lea.vmem [#allocation2], %s163
        %p165 = pneg %p52
        %p166 = pneg %p49
        %p167 = pneg %p78
        %p168 = pneg %p75
        %p169 = scmp.lt.s32.totalorder %s21, 1
        %s170 = scalar_select %p169, %s21, 1
        %s171 = smul.addr %s170, 4
        %s172 = scalar_lea.vmem %s1, %s171
        %p173 = pneg %p104
        %p174 = pneg %p101
        %p175 = scmp.lt.s32.totalorder %s21, 1
        %s176 = scalar_select %p175, %s21, 1
        %s177 = smul.addr %s176, 4
        %s178 = scalar_lea.vmem %s2, %s177
        %s179 = smul.u32 2, %s22
        %p180 = scmp.lt.s32.totalorder %s21, 1
        %s181 = scalar_select %p180, %s21, 1
        %s182 = smul.addr %s181, 4
        %s183 = scalar_lea.vmem %s1, %s182
        %p184 = scmp.lt.s32.totalorder %s21, 1
        %s185 = scalar_select %p184, %s21, 1
        %s186 = smul.addr %s185, 4
        %s187 = scalar_lea.vmem %s2, %s186
        %p188 = scmp.eq.s32.totalorder %s22, 0
        // Predicated region
        $region29: #{tpu_custom_call.1} parent=23 // pred_check
          %p189 = pneg %p188
        $region30: #{tpu_custom_call.1} parent=23 // pred_check_branch
          %191 = sbr.rel (%p189) target = $region32
        $region31: #{tpu_custom_call.1} parent=23 // pred_region
          %vm192 = vcmask 3072
          %193 = vst.msk [vmem:[%s183] sm:$0xf] %vm192, 0.0
          %194 = vst.msk [vmem:[%s187] sm:$0xf] %vm192, 0.0
        $region32: #{tpu_custom_call.1} parent=23 // pred_fallthru
          _
        %s195 = smul.u32 %s22, 256
        %s196 = ssub.s32 256, %s195
        %v197 = vld [vmem:[%s155] sm:$0xff]
        %v198 = vlaneseq
        %v199 = vand.u32 %v198, 127
        %v200 = vadd.s32 %v199, 128
        %v201 = vstv %s196
        %vm202 = vcmp.lt.s32.totalorder %v199, %v201
        %vm203 = vcmp.lt.s32.totalorder %v200, %v201
        %v205 = vcombine.high %v197, %v197
        %v207 = vsel %vm202, %v197, 0.0
        %v208 = vsel %vm203, %v205, 0.0
        %vm209 = vcmask 1043456
        %v210 = vsel %vm209, %v207, 0.0
        %v211 = vsel %vm209, %v208, 0.0
        %v212 = vadd.f32 %v210, %v211
        %213 = vadd.xlane.f32.xlu0 %v212
        %v214 = vpop.xlane.xlu0 %213
        %v215 = vadd.f32 %v214, 0.0
        %v216 = vmul.f32 %v207, %v207
        %v217 = vmul.f32 %v208, %v208
        %v218 = vsel %vm209, %v216, 0.0
        %v219 = vsel %vm209, %v217, 0.0
        %v220 = vadd.f32 %v218, %v219
        %221 = vadd.xlane.f32.xlu0 %v220
        %v222 = vpop.xlane.xlu0 %221
        %v223 = vadd.f32 %v222, 0.0
        %v224 = vld [vmem:[%s183] sm:$0xf]
        %v225 = vadd.f32 %v224, %v215
        %vm226 = vcmask 3072
        %227 = vst.msk [vmem:[%s183] sm:$0xf] %vm226, %v225
        %v228 = vld [vmem:[%s187] sm:$0xf]
        %v229 = vadd.f32 %v228, %v223
        %230 = vst.msk [vmem:[%s187] sm:$0xf] %vm226, %v229
        %p231 = scmp.lt.s32.totalorder %s21, 1
        %s232 = scalar_select %p231, %s21, 1
        %s233 = smul.addr %s232, 4
        %s234 = scalar_lea.vmem %s1, %s233
        %p235 = scmp.lt.s32.totalorder %s21, 1
        %s236 = scalar_select %p235, %s21, 1
        %s237 = smul.addr %s236, 4
        %s238 = scalar_lea.vmem %s2, %s237
        // Predicated region
        $region33: #{tpu_custom_call.1} parent=23 // pred_check
          %p239 = pneg %p75
        $region34: #{tpu_custom_call.1} parent=23 // pred_check_branch
          %241 = sbr.rel (%p239) target = $region36
        $region35: #{tpu_custom_call.1} parent=23 // pred_region
          _
        $region36: #{tpu_custom_call.1} parent=23 // pred_fallthru
          _
        // Predicated region
        $region37: #{tpu_custom_call.1} parent=23 // pred_check
          %p242 = pneg %p101
        $region38: #{tpu_custom_call.1} parent=23 // pred_check_branch
          %244 = sbr.rel (%p242) target = $region40
        $region39: #{tpu_custom_call.1} parent=23 // pred_region
          _
        $region40: #{tpu_custom_call.1} parent=23 // pred_fallthru
          _
      $region24: #{tpu_custom_call.1} parent=5 // pred_fallthru
        _
      %p245 = scmp.le.s32.totalorder 2, %s12
      // Predicated region
      $region41: #{tpu_custom_call.1} parent=5 // pred_check
        %p246 = pneg %p245
      $region42: #{tpu_custom_call.1} parent=5 // pred_check_branch
        %248 = sbr.rel (%p246) target = $region44
      $region43: #{tpu_custom_call.1} parent=5 // pred_region
        %s249 = ssub.s32 %s12, 2
        // Predicated region
        $region45: #{tpu_custom_call.1} parent=43 // pred_check
          %p250 = pneg %p81
        $region46: #{tpu_custom_call.1} parent=43 // pred_check_branch
          %252 = sbr.rel (%p250) target = $region48
        $region47: #{tpu_custom_call.1} parent=43 // pred_region
          %p253 = scmp.lt.s32.totalorder %s23, 1
          %s254 = scalar_select %p253, %s23, 1
          %s255 = smul.addr %s254, 4
          %s256 = scalar_lea.vmem %s1, %s255
        $region48: #{tpu_custom_call.1} parent=43 // pred_fallthru
          _
        // Predicated region
        $region49: #{tpu_custom_call.1} parent=43 // pred_check
          %p257 = pneg %p107
        $region50: #{tpu_custom_call.1} parent=43 // pred_check_branch
          %259 = sbr.rel (%p257) target = $region52
        $region51: #{tpu_custom_call.1} parent=43 // pred_region
          %p260 = scmp.lt.s32.totalorder %s23, 1
          %s261 = scalar_select %p260, %s23, 1
          %s262 = smul.addr %s261, 4
          %s263 = scalar_lea.vmem %s2, %s262
        $region52: #{tpu_custom_call.1} parent=43 // pred_fallthru
          _
      $region44: #{tpu_custom_call.1} parent=5 // pred_fallthru
        _
    $region6: #{tpu_custom_call.1} parent=1 // loop_footer
      %s16 = sadd.s32 1, %s12
    $region7: #{tpu_custom_call.1} parent=1 // loop_footer_branch
      %11 = sbr.rel target = $region3
    $region8: #{tpu_custom_call.1} parent=1 // loop_exit
      _
    %264 = vsyncpa [#allocation3], 1
    %s265 = scalar_lea.sflag [#allocation3], 1
    %266 = vsyncpa %s265, 1

</llo_original>
